<compile_context>
chip_gen: v5e
topology: v5e:2x2
jax: 0.10.0
libtpu: 0.0.40
codegen_flags: <defaults>
</compile_context>

<pallas_src>
import functools
import math

import jax
import jax.numpy as jnp
from jax.experimental import pallas as pl
from jax.experimental.pallas import tpu as pltpu


def _label_smoothing_kernel(x_ref, tgt_ref, colw_ref, o_ref, acc_ref, *,
                            n_rows, true_size, padding_idx, confidence,
                            const_xlogy):
    """Grid = (row_tiles, vocab_tiles); vocab axis is the reduction axis (last)."""
    i = pl.program_id(0)
    j = pl.program_id(1)

    # --- init the (8,128) vreg accumulator once per row tile ----------------
    @pl.when(j == 0)
    def _init():
        acc_ref[...] = jnp.zeros_like(acc_ref)

    tm, tv = x_ref.shape
    x = x_ref[...].astype(jnp.float32)          # (tm, tv) log-probs, f32 in-kernel
    tgt = tgt_ref[...]                          # (tm, 1)  int32 targets
    colw = colw_ref[...]                        # (1, tv)  f32: eps on valid cols, else 0

    # Tiny per-row / per-column index work (O(tm)+O(tv), negligible vs O(tm*tv)).
    rows = i * tm + jax.lax.broadcasted_iota(jnp.int32, (tm, 1), 0)
    row_ok = jnp.logical_and(rows < n_rows, tgt != padding_idx)        # (tm, 1)
    cols = j * tv + jax.lax.broadcasted_iota(jnp.int32, (1, tv), 1)
    col_ok = cols < true_size                                          # (1, tv)

    # Mask x before any multiply: kills uninitialized ragged-tail garbage (rows >= n,
    # cols >= vocab) and zeroes padding rows, so NaN can never reach the sum.
    valid = jnp.logical_and(row_ok, col_ok)                            # (tm, tv)
    xm = jnp.where(valid, x, 0.0)

    # true_dist weight as a single select: confidence on the target column, eps on the
    # other valid columns (colw already zeroes the padding column / out-of-vocab tail).
    is_tgt = cols == tgt                                               # (tm, tv)
    w = jnp.where(is_tgt, confidence, colw)
    contrib = w * xm                                                   # (tm, tv) f32

    # Reduce (tm, tv) -> (8, 128) with tile-aligned static slices: pure vreg tree-adds
    # (no reshape / relayout), then a single vreg RMW of the accumulator per step.
    s = contrib[:, 0:128]
    for b in range(1, tv // 128):
        s = s + contrib[:, b * 128:(b + 1) * 128]
    t = s[0:8, :]
    for a in range(1, tm // 8):
        t = t + s[a * 8:(a + 1) * 8, :]
    acc_ref[...] += t

    # --- finalize once per row tile -----------------------------------------
    @pl.when(j == pl.num_programs(1) - 1)
    def _finalize():
        nonpad_rows = jnp.sum(row_ok.astype(jnp.float32))
        partial = const_xlogy * nonpad_rows - jnp.sum(acc_ref[...])
        # lane-dense (1, 8, 128) output block: unmasked full-vreg store
        o_ref[...] = jnp.full(o_ref.shape, partial, jnp.float32)


def _round_up(a, b):
    return (a + b - 1) // b * b


def label_smoothing_loss(x, target, *, size, padding_idx, smoothing,
                         tm_max=256, tv_max=4096):
    """x: (N, size) float log-probs (f32 or bf16), target: (N,) int. Scalar f32 loss.

    Matches LabelSmoothing.forward: KLDivLoss(reduction='sum')(x, true_dist) with
    true_dist = smoothing/(size-2) everywhere, confidence at the target column,
    padding column zeroed, rows with target == padding_idx zeroed.

    Default tiles (tm<=256, tv<=4096) keep double-buffered VMEM well under v7x's
    64 MiB/TC (and trivially under v5e/v6e's 128 MiB) for both f32 and bf16 inputs.
    """
    n, v = x.shape
    assert v == size
    confidence = 1.0 - smoothing
    eps = smoothing / (size - 2)

    # xlogy(t, t) is piecewise-constant -> fold at trace time (uses the TRUE vocab size).
    const_xlogy = 0.0
    if confidence > 0.0:
        const_xlogy += confidence * math.log(confidence)
    if eps > 0.0:
        const_xlogy += (size - 2) * eps * math.log(eps)

    # Tile selection.  No host-side padding of x: ragged tails are masked in-kernel.
    tm = _round_up(min(tm_max, _round_up(n, 8)), 8)
    # Make sure the "parallel" row axis has >= 2 tiles when there are enough rows, so
    # both v7x TensorCores get work instead of one sitting idle.
    if pl.cdiv(n, tm) < 2 and n > 8:
        tm = _round_up(pl.cdiv(n, 2), 8)
    tv = _round_up(min(tv_max, _round_up(v, 128)), 128)

    n_i = pl.cdiv(n, tm)
    n_j = pl.cdiv(v, tv)

    # Tiny per-column eps weight row, built directly at the padded grid width (this is
    # O(vocab) floats, not a copy of the full logits tensor).
    col_idx = jnp.arange(n_j * tv, dtype=jnp.int32)
    colw = jnp.where(
        jnp.logical_and(col_idx < size, col_idx != padding_idx),
        jnp.float32(eps), jnp.float32(0.0)).reshape(1, n_j * tv)

    tgt2d = target.astype(jnp.int32).reshape(n, 1)

    kernel = functools.partial(
        _label_smoothing_kernel,
        n_rows=n, true_size=size, padding_idx=padding_idx,
        confidence=confidence, const_xlogy=const_xlogy)

    partials = pl.pallas_call(
        kernel,
        out_shape=jax.ShapeDtypeStruct((n_i, 8, 128), jnp.float32),
        grid=(n_i, n_j),
        in_specs=[
            pl.BlockSpec((tm, tv), lambda i, j: (i, j)),   # x tile (streamed, native dtype)
            pl.BlockSpec((tm, 1), lambda i, j: (i, 0)),    # targets for this row tile
            pl.BlockSpec((1, tv), lambda i, j: (0, j)),    # per-column eps weights
        ],
        out_specs=pl.BlockSpec((1, 8, 128), lambda i, j: (i, 0, 0)),
        scratch_shapes=[pltpu.VMEM((8, 128), jnp.float32)],  # single-vreg f32 accumulator
        compiler_params=pltpu.CompilerParams(
            dimension_semantics=("parallel", "arbitrary"),   # rows parallel, vocab = reduction
            vmem_limit_bytes=32 * 1024 * 1024),              # well under v7x's 64 MiB/TC
    )(x, tgt2d, colw)

    # tiny host-side reduction over row-tile partials (one scalar per row tile)
    return jnp.sum(partials[:, 0, 0])


def _reference(x, target, *, size, padding_idx, smoothing):
    """Pure-JAX reference matching the PyTorch LabelSmoothing module semantics."""
    n, v = x.shape
    confidence = 1.0 - smoothing
    td = jnp.full((n, v), smoothing / (size - 2), dtype=jnp.float32)
    td = td.at[jnp.arange(n), target].set(confidence)
    td = td.at[:, padding_idx].set(0.0)
    td = jnp.where((target == padding_idx)[:, None], 0.0, td)
    xlogy = jnp.where(td > 0, td * jnp.log(td), 0.0)
    return jnp.sum(xlogy - td * x.astype(jnp.float32))


if __name__ == "__main__":
    key = jax.random.PRNGKey(0)
    N, SIZE = 16, 300            # 16 tokens, vocab 300 (exercises ragged lane tail)
    PADDING_IDX = 0
    SMOOTHING = 0.1

    k_logits, k_tgt = jax.random.split(key)
    logits = jax.random.normal(k_logits, (N, SIZE), dtype=jnp.float32)
    x = jax.nn.log_softmax(logits, axis=-1)            # module expects log-probs
    target = jax.random.randint(k_tgt, (N,), 0, SIZE, dtype=jnp.int32)
    target = target.at[3].set(PADDING_IDX)             # exercise padding-row masking
    target = target.at[11].set(PADDING_IDX)

    ref = _reference(x, target, size=SIZE, padding_idx=PADDING_IDX,
                     smoothing=SMOOTHING)

    # small tiles -> real (row_tiles=2, vocab_tiles=3) grid with a ragged vocab tail
    loss = label_smoothing_loss(
        x, target, size=SIZE, padding_idx=PADDING_IDX, smoothing=SMOOTHING,
        tm_max=8, tv_max=128)
    loss = jax.block_until_ready(loss)
    assert jnp.allclose(loss, ref, rtol=1e-4, atol=1e-4), (loss, ref)

    # default tiles -> single ragged vocab tile (300 -> 384), 2 row tiles
    loss_big = label_smoothing_loss(
        x, target, size=SIZE, padding_idx=PADDING_IDX, smoothing=SMOOTHING)
    loss_big = jax.block_until_ready(loss_big)
    assert jnp.allclose(loss_big, ref, rtol=1e-4, atol=1e-4), (loss_big, ref)

    # bf16 streaming path (no host-side f32 cast; kernel casts after DMA)
    x_bf16 = x.astype(jnp.bfloat16)
    loss_bf16 = label_smoothing_loss(
        x_bf16, target, size=SIZE, padding_idx=PADDING_IDX, smoothing=SMOOTHING,
        tm_max=8, tv_max=128)
    loss_bf16 = jax.block_until_ready(loss_bf16)
    ref_bf16 = _reference(x_bf16.astype(jnp.float32), target, size=SIZE,
                          padding_idx=PADDING_IDX, smoothing=SMOOTHING)
    assert jnp.allclose(loss_bf16, ref_bf16, rtol=1e-3, atol=1e-3), (loss_bf16, ref_bf16)

    print("KERNEL_OK")
</pallas_src>

<mosaic_0001>
module attributes {stable_mosaic.version = 11 : i64} {
  func.func @_label_smoothing_kernel(%arg0: i32, %arg1: i32, %arg2: memref<8x128xf32, #tpu.memory_space<vmem>>, %arg3: memref<8x1xi32, #tpu.memory_space<vmem>>, %arg4: memref<1x128xf32, #tpu.memory_space<vmem>>, %arg5: memref<1x8x128xf32, #tpu.memory_space<vmem>>, %arg6: memref<8x128xf32, #tpu.memory_space<vmem>>) attributes {dimension_semantics = [#tpu.dimension_semantics<parallel>, #tpu.dimension_semantics<arbitrary>], iteration_bounds = array<i64: 2, 3>, scalar_prefetch = 0 : i64, scratch_operands = 1 : i64, tpu.core_type = #tpu.core_type<tc>, window_params = [{transform_indices = @transform_0, window_bounds = array<i64: 8, 128>}, {transform_indices = @transform_1, window_bounds = array<i64: 8, 1>}, {transform_indices = @transform_2, window_bounds = array<i64: 1, 128>}, {transform_indices = @transform_3, window_bounds = array<i64: 1, 8, 128>}]} {
    %c0_i32 = arith.constant 0 : i32
    %0 = arith.cmpi eq, %arg1, %c0_i32 : i32
    %1 = arith.extui %0 : i1 to i32
    %c0_i32_0 = arith.constant 0 : i32
    %2 = arith.cmpi ne, %1, %c0_i32_0 : i32
    scf.if %2 {
      %cst_13 = arith.constant 0.000000e+00 : f32
      %40 = vector.broadcast %cst_13 : f32 to vector<8x128xf32>
      %c0_14 = arith.constant 0 : index
      %c0_15 = arith.constant 0 : index
      %41 = vector.load %arg6[%c0_14, %c0_15] : memref<8x128xf32, #tpu.memory_space<vmem>>, vector<8x128xf32>
      tpu.vector_store %arg6[%c0_14, %c0_15], %40 {strides = array<i32>} : memref<8x128xf32, #tpu.memory_space<vmem>>, vector<8x128xf32>,
    } else {
    }
    %c0 = arith.constant 0 : index
    %c0_1 = arith.constant 0 : index
    %3 = vector.load %arg2[%c0, %c0_1] : memref<8x128xf32, #tpu.memory_space<vmem>>, vector<8x128xf32>
    %c0_2 = arith.constant 0 : index
    %c0_3 = arith.constant 0 : index
    %4 = vector.load %arg3[%c0_2, %c0_3] : memref<8x1xi32, #tpu.memory_space<vmem>>, vector<8x1xi32>
    %c0_4 = arith.constant 0 : index
    %c0_5 = arith.constant 0 : index
    %5 = vector.load %arg4[%c0_4, %c0_5] : memref<1x128xf32, #tpu.memory_space<vmem>>, vector<1x128xf32>
    %c8_i32 = arith.constant 8 : i32
    %6 = arith.muli %arg0, %c8_i32 : i32
    %7 = tpu.iota {dimensions = array<i32: 0>} : vector<8x1xi32>
    %8 = vector.broadcast %6 : i32 to vector<8x1xi32>
    %9 = arith.addi %8, %7 : vector<8x1xi32>
    %c16_i32 = arith.constant 16 : i32
    %10 = vector.broadcast %c16_i32 : i32 to vector<8x1xi32>
    %11 = arith.cmpi slt, %9, %10 : vector<8x1xi32>
    %c0_i32_6 = arith.constant 0 : i32
    %12 = vector.broadcast %c0_i32_6 : i32 to vector<8x1xi32>
    %13 = arith.cmpi ne, %4, %12 : vector<8x1xi32>
    %14 = arith.andi %11, %13 : vector<8x1xi1>
    %c128_i32 = arith.constant 128 : i32
    %15 = arith.muli %arg1, %c128_i32 : i32
    %16 = tpu.iota {dimensions = array<i32: 1>} : vector<1x128xi32>
    %17 = vector.broadcast %15 : i32 to vector<1x128xi32>
    %18 = arith.addi %17, %16 : vector<1x128xi32>
    %c300_i32 = arith.constant 300 : i32
    %19 = vector.broadcast %c300_i32 : i32 to vector<1x128xi32>
    %20 = arith.cmpi slt, %18, %19 : vector<1x128xi32>
    %21 = vector.broadcast %14 : vector<8x1xi1> to vector<8x128xi1>
    %22 = vector.broadcast %20 : vector<1x128xi1> to vector<8x128xi1>
    %23 = arith.andi %21, %22 : vector<8x128xi1>
    %cst = arith.constant 0.000000e+00 : f32
    %24 = vector.broadcast %cst : f32 to vector<8x128xf32>
    %25 = arith.select %23, %3, %24 : vector<8x128xi1>, vector<8x128xf32>
    %26 = vector.broadcast %18 : vector<1x128xi32> to vector<8x128xi32>
    %27 = vector.broadcast %4 : vector<8x1xi32> to vector<8x128xi32>
    %28 = arith.cmpi eq, %26, %27 : vector<8x128xi32>
    %cst_7 = arith.constant 0.899999976 : f32
    %29 = vector.broadcast %cst_7 : f32 to vector<8x128xf32>
    %30 = vector.shape_cast %5 : vector<1x128xf32> to vector<1x128xf32>
    %31 = vector.broadcast %30 : vector<1x128xf32> to vector<8x128xf32>
    %32 = arith.select %28, %29, %31 : vector<8x128xi1>, vector<8x128xf32>
    %33 = arith.mulf %32, %25 : vector<8x128xf32>
    %c0_8 = arith.constant 0 : index
    %c0_9 = arith.constant 0 : index
    %34 = vector.load %arg6[%c0_8, %c0_9] : memref<8x128xf32, #tpu.memory_space<vmem>>, vector<8x128xf32>
    %35 = arith.addf %34, %33 : vector<8x128xf32>
    %c0_10 = arith.constant 0 : index
    %c0_11 = arith.constant 0 : index
    %36 = vector.load %arg6[%c0_10, %c0_11] : memref<8x128xf32, #tpu.memory_space<vmem>>, vector<8x128xf32>
    tpu.vector_store %arg6[%c0_10, %c0_11], %35 {strides = array<i32>} : memref<8x128xf32, #tpu.memory_space<vmem>>, vector<8x128xf32>,
    %c2_i32 = arith.constant 2 : i32
    %37 = arith.cmpi eq, %arg1, %c2_i32 : i32
    %38 = arith.extui %37 : i1 to i32
    %c0_i32_12 = arith.constant 0 : i32
    %39 = arith.cmpi ne, %38, %c0_i32_12 : i32
    scf.if %39 {
      %40 = arith.extui %14 : vector<8x1xi1> to vector<8x1xi32>
      %41 = arith.sitofp %40 : vector<8x1xi32> to vector<8x1xf32>
      %42 = vector.shape_cast %41 : vector<8x1xf32> to vector<1x8x1xf32>
      %cst_13 = arith.constant dense<0.000000e+00> : vector<1xf32>
      %43 = vector.multi_reduction <add>, %42, %cst_13 [1, 2] : vector<1x8x1xf32> to vector<1xf32>
      %44 = vector.shape_cast %43 : vector<1xf32> to vector<1x1x1xf32>
      %45 = vector.extract %44[0, 0, 0] : f32 from vector<1x1x1xf32>
      %cst_14 = arith.constant -0.894792318 : f32
      %46 = arith.mulf %cst_14, %45 : f32
      %c0_15 = arith.constant 0 : index
      %c0_16 = arith.constant 0 : index
      %47 = vector.load %arg6[%c0_15, %c0_16] : memref<8x128xf32, #tpu.memory_space<vmem>>, vector<8x128xf32>
      %48 = vector.shape_cast %47 : vector<8x128xf32> to vector<1x8x128xf32>
      %cst_17 = arith.constant dense<0.000000e+00> : vector<1xf32>
      %49 = vector.multi_reduction <add>, %48, %cst_17 [1, 2] : vector<1x8x128xf32> to vector<1xf32>
      %50 = vector.shape_cast %49 : vector<1xf32> to vector<1x1x1xf32>
      %51 = vector.extract %50[0, 0, 0] : f32 from vector<1x1x1xf32>
      %52 = arith.subf %46, %51 : f32
      %53 = vector.broadcast %52 : f32 to vector<1x8x128xf32>
      %c0_18 = arith.constant 0 : index
      %c0_19 = arith.constant 0 : index
      %c0_20 = arith.constant 0 : index
      %54 = vector.load %arg5[%c0_18, %c0_19, %c0_20] : memref<1x8x128xf32, #tpu.memory_space<vmem>>, vector<1x8x128xf32>
      tpu.vector_store %arg5[%c0_18, %c0_19, %c0_20], %53 {strides = array<i32>} : memref<1x8x128xf32, #tpu.memory_space<vmem>>, vector<1x8x128xf32>,
    } else {
    }
    return
  }
  func.func @transform_0(%arg0: i32, %arg1: i32) -> (i32, i32) {
    %c0_i32 = arith.constant 0 : i32
    return %arg0, %arg1 : i32, i32
  }
  func.func @transform_1(%arg0: i32, %arg1: i32) -> (i32, i32) {
    %c0_i32 = arith.constant 0 : i32
    %c0_i32_0 = arith.constant 0 : i32
    return %arg0, %c0_i32 : i32, i32
  }
  func.func @transform_2(%arg0: i32, %arg1: i32) -> (i32, i32) {
    %c0_i32 = arith.constant 0 : i32
    %c0_i32_0 = arith.constant 0 : i32
    return %c0_i32, %arg1 : i32, i32
  }
  func.func @transform_3(%arg0: i32, %arg1: i32) -> (i32, i32, i32) {
    %c0_i32 = arith.constant 0 : i32
    %c0_i32_0 = arith.constant 0 : i32
    %c0_i32_1 = arith.constant 0 : i32
    return %arg0, %c0_i32, %c0_i32_0 : i32, i32, i32
  }
}

</mosaic_0001>

<llo_original>
// kernel: tpu_custom_call.1
$region0: #{tpu_custom_call.1}
  #allocation0 [shape = 'u32[]', space=smem, size = 0x4, offset = 0x4, fixed_abs, tag = 'smem constant byte address 0x4 - core index']
  #allocation1 [shape = 'u32[72,128]{1,0:T(1,128)}', space=vmem, size = 0x9000, scoped, tag = 'internal scratch']
  #allocation2 [shape = 'f32[8,128]{1,0:T(8,128)}', space=vmem, size = 0x1000, scoped, tag = 'scratch operand']
  %s0 = inlined_call_operand.hbm [shape: f32[16,300], index: 0, kind: input, shape index: {}]
  %s1 = inlined_call_operand.vmem [shape: s32[16,1], index: 1, kind: input, shape index: {}]
  %s2 = inlined_call_operand.vmem [shape: f32[1,384], index: 2, kind: input, shape index: {}]
  %s3 = inlined_call_operand.hbm [shape: f32[2,8,128], index: 3, kind: output, shape index: {}]
  %s4 = sld [smem:[#allocation0]]
  $region57: #{tpu_custom_call.1} parent=0
    _
  %s6 = ssub.s32 1, %s4
  %s7 = scalar_select 0, %s6, %s4
  $region1: #{tpu_custom_call.1} parent=0
    #allocation3 [shape = 'u8[8192]{0}', space=vmem, size = 0x2000, scoped, tag = 'input window, operand 0']
    #allocation4 [shape = 's32[2]{0}', space=sflag, size = 0x8, scoped, tag = 'scoped memory for tpu_custom_call.1']
    #allocation5 [shape = 's32[2]{0}', space=sflag, size = 0x8, scoped, tag = 'scoped memory for tpu_custom_call.1']
    #allocation6 [shape = 'u8[8192]{0}', space=vmem, size = 0x2000, scoped, tag = 'output window, operand 0']
    %8 = vsyncpa [#allocation4], 0
    %s9 = scalar_lea.sflag [#allocation4], 1
    %10 = vsyncpa %s9, 0
    %11 = vsyncpa [#allocation5], 0
    %s12 = scalar_lea.sflag [#allocation5], 1
    %13 = vsyncpa %s12, 0
    loop: start=0, step=1, limit=8
    $region2: #{tpu_custom_call.1} parent=1 // loop_pre_header
      _
    $region3: #{tpu_custom_call.1} parent=1 // loop_header
      %s15 = sphi 0, %s19
      %p16 = scmp.ge.s32.totalorder %s15, 8
      %s22 = sphi 0, %s34
      %s23 = sphi 0, %s30
      %s24 = sphi 0, %s22
      %s25 = sphi 0, %s23
      %s26 = sphi 0, %s24
      %s27 = sphi 0, %s25
      %s39 = sphi 0, %s41
      %s42 = sphi 0, %s39
      %s43 = sphi 0, %s42
      %s59 = sphi 0, %s43
      %s65 = sphi 0, %s67
      %s68 = sphi 0, %s65
      %s69 = sphi 0, %s68
      %s85 = sphi 0, %s69
      %s91 = sphi 0, %s93
      %s94 = sphi 0, %s91
      %s95 = sphi 0, %s94
      %s111 = sphi 0, %s95
      %s117 = sphi 0, %s119
      %s120 = sphi 0, %s117
      %s121 = sphi 0, %s120
      %s137 = sphi 0, %s121
    $region4: #{tpu_custom_call.1} parent=1 // loop_header_branch
      %18 = sbr.rel (%p16) target = $region8
    $region5: #{tpu_custom_call.1} parent=1 // loop_body
      %s20 = ssub.s32 %s15, 1
      %s21 = ssub.s32 %s15, 2
      %s28 = sadd.s32 1, %s23
      %p29 = scmp.ge.s32.totalorder %s28, 3
      %s30 = scalar_select %p29, 0, %s28
      %s31 = sadd.s32 1, %s22
      %s32 = scalar_select %p29, %s31, %s22
      %p33 = scmp.ge.s32.totalorder %s32, 2
      %s34 = scalar_select %p33, 0, %s32
      %s35 = ssub.s32 %s22, %s34
      %s36 = ssub.s32 %s23, %s30
      %s37 = sor.u32 %s35, %s36
      %p38 = scmp.eq.s32.totalorder %s37, 0
      %s40 = sadd.s32 %s39, 1
      %s41 = scalar_select %p38, %s39, %s40
      %p44 = pneg %p38
      %p45 = scmp.eq.s32.totalorder %s15, 5
      %p46 = por %p44, %p45
      %p47 = scmp.ne.s32.totalorder %s39, %s42
      %p48 = scmp.eq.s32.totalorder %s15, 0
      %p49 = por %p47, %p48
      %p50 = scmp.ne.s32.totalorder %s39, %s42
      %p51 = scmp.eq.s32.totalorder %s20, 5
      %p52 = por %p50, %p51
      %p53 = scmp.ne.s32.totalorder %s42, %s43
      %p54 = scmp.eq.s32.totalorder %s20, 0
      %p55 = por %p53, %p54
      %p56 = scmp.ne.s32.totalorder %s42, %s43
      %p57 = scmp.eq.s32.totalorder %s21, 5
      %p58 = por %p56, %p57
      %p60 = scmp.ne.s32.totalorder %s43, %s59
      %p61 = scmp.eq.s32.totalorder %s21, 0
      %p62 = por %p60, %p61
      %s63 = ssub.s32 %s22, %s34
      %p64 = scmp.eq.s32.totalorder %s63, 0
      %s66 = sadd.s32 %s65, 1
      %s67 = scalar_select %p64, %s65, %s66
      %p70 = pneg %p64
      %p71 = scmp.eq.s32.totalorder %s15, 5
      %p72 = por %p70, %p71
      %p73 = scmp.ne.s32.totalorder %s65, %s68
      %p74 = scmp.eq.s32.totalorder %s15, 0
      %p75 = por %p73, %p74
      %p76 = scmp.ne.s32.totalorder %s65, %s68
      %p77 = scmp.eq.s32.totalorder %s20, 5
      %p78 = por %p76, %p77
      %p79 = scmp.ne.s32.totalorder %s68, %s69
      %p80 = scmp.eq.s32.totalorder %s20, 0
      %p81 = por %p79, %p80
      %p82 = scmp.ne.s32.totalorder %s68, %s69
      %p83 = scmp.eq.s32.totalorder %s21, 5
      %p84 = por %p82, %p83
      %p86 = scmp.ne.s32.totalorder %s69, %s85
      %p87 = scmp.eq.s32.totalorder %s21, 0
      %p88 = por %p86, %p87
      %s89 = ssub.s32 %s23, %s30
      %p90 = scmp.eq.s32.totalorder %s89, 0
      %s92 = sadd.s32 %s91, 1
      %s93 = scalar_select %p90, %s91, %s92
      %p96 = pneg %p90
      %p97 = scmp.eq.s32.totalorder %s15, 5
      %p98 = por %p96, %p97
      %p99 = scmp.ne.s32.totalorder %s91, %s94
      %p100 = scmp.eq.s32.totalorder %s15, 0
      %p101 = por %p99, %p100
      %p102 = scmp.ne.s32.totalorder %s91, %s94
      %p103 = scmp.eq.s32.totalorder %s20, 5
      %p104 = por %p102, %p103
      %p105 = scmp.ne.s32.totalorder %s94, %s95
      %p106 = scmp.eq.s32.totalorder %s20, 0
      %p107 = por %p105, %p106
      %p108 = scmp.ne.s32.totalorder %s94, %s95
      %p109 = scmp.eq.s32.totalorder %s21, 5
      %p110 = por %p108, %p109
      %p112 = scmp.ne.s32.totalorder %s95, %s111
      %p113 = scmp.eq.s32.totalorder %s21, 0
      %p114 = por %p112, %p113
      %s115 = ssub.s32 %s22, %s34
      %p116 = scmp.eq.s32.totalorder %s115, 0
      %s118 = sadd.s32 %s117, 1
      %s119 = scalar_select %p116, %s117, %s118
      %p122 = pneg %p116
      %p123 = scmp.eq.s32.totalorder %s15, 5
      %p124 = por %p122, %p123
      %p125 = scmp.ne.s32.totalorder %s117, %s120
      %p126 = scmp.eq.s32.totalorder %s15, 0
      %p127 = por %p125, %p126
      %p128 = scmp.ne.s32.totalorder %s117, %s120
      %p129 = scmp.eq.s32.totalorder %s20, 5
      %p130 = por %p128, %p129
      %p131 = scmp.ne.s32.totalorder %s120, %s121
      %p132 = scmp.eq.s32.totalorder %s20, 0
      %p133 = por %p131, %p132
      %p134 = scmp.ne.s32.totalorder %s120, %s121
      %p135 = scmp.eq.s32.totalorder %s21, 5
      %p136 = por %p134, %p135
      %p138 = scmp.ne.s32.totalorder %s121, %s137
      %p139 = scmp.eq.s32.totalorder %s21, 0
      %p140 = por %p138, %p139
      %p141 = scmp.le.s32.totalorder 1, %s15
      %p142 = scmp.lt.s32.totalorder %s15, 7
      %p143 = pnand %p141, %p142
      %p144 = pneg %p143
      // Predicated region
      $region9: #{tpu_custom_call.1} parent=5 // pred_check
        _
      $region10: #{tpu_custom_call.1} parent=5 // pred_check_branch
        %146 = sbr.rel (%p143) target = $region12
      $region11: #{tpu_custom_call.1} parent=5 // pred_region
        %s147 = ssub.s32 %s15, 1
      $region12: #{tpu_custom_call.1} parent=5 // pred_fallthru
        _
      %p148 = scmp.lt.s32.totalorder %s15, 6
      // Predicated region
      $region13: #{tpu_custom_call.1} parent=5 // pred_check
        %p149 = pneg %p148
      $region14: #{tpu_custom_call.1} parent=5 // pred_check_branch
        %151 = sbr.rel (%p149) target = $region16
      $region15: #{tpu_custom_call.1} parent=5 // pred_region
        // Predicated region
        $region17: #{tpu_custom_call.1} parent=15 // pred_check
          %p152 = pneg %p49
        $region18: #{tpu_custom_call.1} parent=15 // pred_check_branch
          %154 = sbr.rel (%p152) target = $region20
        $region19: #{tpu_custom_call.1} parent=15 // pred_region
          %s155 = sand.u32 %s39, 1
          %s156 = scalar_lea.sflag [#allocation4], %s155
          %s157 = sand.u32 %s39, 1
          %s158 = smul.addr %s157, 8
          %s159 = scalar_lea.vmem [#allocation3], %s158
          %161 = vsyncadd %s156, 0
          %s162 = smul.addr %s22, 3
          %s163 = sadd.s32 %s23, %s162
          %s164 = smul.addr %s163, 8
          %s165 = scalar_lea.hbm %s0, %s164
          %s167 = sshll.u32 %s165, 4
          %s168 = int_to_ptr.hbm [resolvable:$true] %s167
          %s169 = sshll.u32 %s159, 4
          %s170 = int_to_ptr.vmem [resolvable:$true] %s169
          %172 = dma.hbm_to_vmem [thread:$0]  %s168, 128, %s170, %s156
        $region20: #{tpu_custom_call.1} parent=15 // pred_fallthru
          _
        // Predicated region
        $region21: #{tpu_custom_call.1} parent=15 // pred_check
          %p173 = pneg %p75
        $region22: #{tpu_custom_call.1} parent=15 // pred_check_branch
          %175 = sbr.rel (%p173) target = $region24
        $region23: #{tpu_custom_call.1} parent=15 // pred_region
          %p176 = scmp.lt.s32.totalorder %s22, 1
          %s177 = scalar_select %p176, %s22, 1
          %s178 = smul.addr %s177, 8
          %s179 = scalar_lea.vmem %s1, %s178
        $region24: #{tpu_custom_call.1} parent=15 // pred_fallthru
          _
        // Predicated region
        $region25: #{tpu_custom_call.1} parent=15 // pred_check
          %p180 = pneg %p101
        $region26: #{tpu_custom_call.1} parent=15 // pred_check_branch
          %182 = sbr.rel (%p180) target = $region28
        $region27: #{tpu_custom_call.1} parent=15 // pred_region
          %p183 = scmp.lt.s32.totalorder %s23, 2
          %s184 = scalar_select %p183, %s23, 2
          %s185 = scalar_lea.vmem %s2, %s184
        $region28: #{tpu_custom_call.1} parent=15 // pred_fallthru
          _
      $region16: #{tpu_custom_call.1} parent=5 // pred_fallthru
        _
      %p186 = scmp.le.s32.totalorder 1, %s15
      %p187 = scmp.lt.s32.totalorder %s15, 7
      %p188 = pnand %p186, %p187
      %p189 = pneg %p188
      // Predicated region
      $region29: #{tpu_custom_call.1} parent=5 // pred_check
        _
      $region30: #{tpu_custom_call.1} parent=5 // pred_check_branch
        %191 = sbr.rel (%p188) target = $region32
      $region31: #{tpu_custom_call.1} parent=5 // pred_region
        %s192 = ssub.s32 %s15, 1
        %s193 = sand.u32 %s42, 1
        %s194 = scalar_lea.sflag [#allocation4], %s193
        %s195 = sand.u32 %s42, 1
        %s196 = smul.addr %s195, 8
        %s197 = scalar_lea.vmem [#allocation3], %s196
        // Predicated region
        $region33: #{tpu_custom_call.1} parent=31 // pred_check
          %p198 = pneg %p55
        $region34: #{tpu_custom_call.1} parent=31 // pred_check_branch
          %200 = sbr.rel (%p198) target = $region36
        $region35: #{tpu_custom_call.1} parent=31 // pred_region
          %202 = dma.done %s194, 128
        $region36: #{tpu_custom_call.1} parent=31 // pred_fallthru
          _
        %s203 = sand.u32 %s42, 1
        %s204 = scalar_lea.sflag [#allocation4], %s203
        %s205 = sand.u32 %s42, 1
        %s206 = smul.addr %s205, 8
        %s207 = scalar_lea.vmem [#allocation3], %s206
        %p208 = pneg %p55
        %p209 = pneg %p52
        %p210 = scmp.lt.s32.totalorder %s24, 1
        %s211 = scalar_select %p210, %s24, 1
        %s212 = smul.addr %s211, 8
        %s213 = scalar_lea.vmem %s1, %s212
        %p214 = pneg %p81
        %p215 = pneg %p78
        %p216 = scmp.lt.s32.totalorder %s25, 2
        %s217 = scalar_select %p216, %s25, 2
        %s218 = scalar_lea.vmem %s2, %s217
        %p219 = pneg %p107
        %p220 = pneg %p104
        %p221 = pneg %p133
        %p222 = pneg %p130
        %s223 = sand.u32 %s120, 1
        %s224 = scalar_lea.sflag [#allocation5], %s223
        %s225 = sand.u32 %s120, 1
        %s226 = smul.addr %s225, 8
        %s227 = scalar_lea.vmem [#allocation6], %s226
        %p228 = scmp.lt.s32.totalorder %s24, 1
        %s229 = scalar_select %p228, %s24, 1
        %s230 = smul.addr %s229, 8
        %s231 = scalar_lea.vmem %s1, %s230
        %p232 = scmp.lt.s32.totalorder %s25, 2
        %s233 = scalar_select %p232, %s25, 2
        %s234 = scalar_lea.vmem %s2, %s233
        %p235 = scmp.eq.s32.totalorder %s25, 0
        // Predicated region
        $region37: #{tpu_custom_call.1} parent=31 // pred_check
          %p236 = pneg %p235
        $region38: #{tpu_custom_call.1} parent=31 // pred_check_branch
          %238 = sbr.rel (%p236) target = $region40
        $region39: #{tpu_custom_call.1} parent=31 // pred_region
          %239 = vst [vmem:[#allocation2] sm:$0xff] 0.0
        $region40: #{tpu_custom_call.1} parent=31 // pred_fallthru
          _
        %v240 = vld [vmem:[%s197] sm:$0xff]
        %v241 = vld [vmem:[%s231] sm:$0xff]
        %v242 = vld [vmem:[%s234] sm:$0x1]
        %s243 = smul.u32 %s24, 8
        %v244 = vlaneseq
        %v245 = vshrl.u32 %v244, 7
        %v246 = vstv %s243
        %v247 = vadd.s32 %v246, %v245
        %vm248 = vcmp.lt.s32.totalorder %v247, 16
        %vm249 = vcmp.ne.s32.totalorder %v241, 0
        %vm250 = vmand %vm248, %vm249
        %s251 = smul.u32 %s25, 128
        %v252 = vlaneseq
        %v253 = vand.u32 %v252, 127
        %v254 = vstv %s251
        %v255 = vadd.s32 %v254, %v253
        %vm256 = vcmp.lt.s32.totalorder %v255, 300
        %v257 = vsel %vm250, 1, 0
        %258 = vset.pattern.permute.xlu0 0
        %259 = vperm.xlu0 %258, %v257
        %v260 = vpop.permute.xlu0 %259
        %vm261 = vcmp.eq.s32.totalorder %v260, 1
        %v262 = vsel %vm256, 1, 0
        %vm263 = vcmp.eq.s32.totalorder %v262, 1
        %vm264 = vmand %vm261, %vm263
        %v265 = vsel %vm264, %v240, 0.0
        %266 = vset.pattern.permute.xlu0 0
        %267 = vperm.xlu0 %266, %v241
        %v268 = vpop.permute.xlu0 %267
        %vm269 = vcmp.eq.s32.totalorder %v255, %v268
        %v271 = vperm.slane %v242, 0
        %v273 = vsel %vm269, 0.9, %v271
        %v274 = vmul.f32 %v273, %v265
        %v275 = vld [vmem:[#allocation2] sm:$0xff]
        %v276 = vadd.f32 %v275, %v274
        %277 = vst [vmem:[#allocation2] sm:$0xff] %v276
        %p278 = scmp.eq.s32.totalorder %s25, 2
        // Predicated region
        $region41: #{tpu_custom_call.1} parent=31 // pred_check
          %p279 = pneg %p278
        $region42: #{tpu_custom_call.1} parent=31 // pred_check_branch
          %281 = sbr.rel (%p279) target = $region44
        $region43: #{tpu_custom_call.1} parent=31 // pred_region
          %v282 = vcvt.s32.f32 %v257
          %vm283 = vcmask 7168
          %v284 = vsel %vm283, %v282, 0.0
          %285 = vadd.xlane.f32.xlu0 %v284
          %v286 = vpop.xlane.xlu0 %285
          %v287 = vrot.slane %v286, 4
          %v288 = vadd.f32 %v286, %v287
          %v289 = vrot.slane %v288, 2
          %v290 = vadd.f32 %v288, %v289
          %v291 = vrot.slane %v290, 1
          %v292 = vadd.f32 %v290, %v291
          %s293 = vtos %v292
          %s294 = smul.f32 %s293, -0.8947923
          %v295 = vld [vmem:[#allocation2] sm:$0xff]
          %296 = vadd.xlane.f32.xlu0 %v295
          %v297 = vpop.xlane.xlu0 %296
          %v298 = vrot.slane %v297, 4
          %v299 = vadd.f32 %v297, %v298
          %v300 = vrot.slane %v299, 2
          %v301 = vadd.f32 %v299, %v300
          %v302 = vrot.slane %v301, 1
          %v303 = vadd.f32 %v301, %v302
          %s304 = vtos %v303
          %s305 = ssub.f32 %s294, %s304
          %v306 = vstv %s305
          %307 = vst [vmem:[%s227] sm:$0xff] %v306
        $region44: #{tpu_custom_call.1} parent=31 // pred_fallthru
          _
        %s308 = sand.u32 %s120, 1
        %s309 = scalar_lea.sflag [#allocation5], %s308
        %s310 = sand.u32 %s120, 1
        %s311 = smul.addr %s310, 8
        %s312 = scalar_lea.vmem [#allocation6], %s311
        // Predicated region
        $region45: #{tpu_custom_call.1} parent=31 // pred_check
          %p313 = pneg %p130
        $region46: #{tpu_custom_call.1} parent=31 // pred_check_branch
          %315 = sbr.rel (%p313) target = $region48
        $region47: #{tpu_custom_call.1} parent=31 // pred_region
          %317 = vsyncadd %s309, 0
          %s318 = smul.addr %s24, 8
          %s319 = scalar_lea.hbm %s3, %s318
          %s321 = sshll.u32 %s312, 4
          %s322 = int_to_ptr.vmem [resolvable:$true] %s321
          %s323 = sshll.u32 %s319, 4
          %s324 = int_to_ptr.hbm [resolvable:$true] %s323
          %326 = dma.vmem_to_hbm [thread:$0]  %s322, 128, %s324, %s309
        $region48: #{tpu_custom_call.1} parent=31 // pred_fallthru
          _
      $region32: #{tpu_custom_call.1} parent=5 // pred_fallthru
        _
      %p327 = scmp.le.s32.totalorder 2, %s15
      // Predicated region
      $region49: #{tpu_custom_call.1} parent=5 // pred_check
        %p328 = pneg %p327
      $region50: #{tpu_custom_call.1} parent=5 // pred_check_branch
        %330 = sbr.rel (%p328) target = $region52
      $region51: #{tpu_custom_call.1} parent=5 // pred_region
        %s331 = ssub.s32 %s15, 2
        // Predicated region
        $region53: #{tpu_custom_call.1} parent=51 // pred_check
          %p332 = pneg %p136
        $region54: #{tpu_custom_call.1} parent=51 // pred_check_branch
          %334 = sbr.rel (%p332) target = $region56
        $region55: #{tpu_custom_call.1} parent=51 // pred_region
          %s335 = sand.u32 %s121, 1
          %s336 = scalar_lea.sflag [#allocation5], %s335
          %s337 = sand.u32 %s121, 1
          %s338 = smul.addr %s337, 8
          %s339 = scalar_lea.vmem [#allocation6], %s338
          %341 = dma.done %s336, 128
        $region56: #{tpu_custom_call.1} parent=51 // pred_fallthru
          _
      $region52: #{tpu_custom_call.1} parent=5 // pred_fallthru
        _
    $region6: #{tpu_custom_call.1} parent=1 // loop_footer
      %s19 = sadd.s32 1, %s15
    $region7: #{tpu_custom_call.1} parent=1 // loop_footer_branch
      %14 = sbr.rel target = $region3
    $region8: #{tpu_custom_call.1} parent=1 // loop_exit
      _
    %342 = vsyncpa [#allocation4], 1
    %s343 = scalar_lea.sflag [#allocation4], 1
    %344 = vsyncpa %s343, 1
    %345 = vsyncpa [#allocation5], 1
    %s346 = scalar_lea.sflag [#allocation5], 1
    %347 = vsyncpa %s346, 1

</llo_original>
